<compile_context>
chip_gen: v7x
topology: tpu7x:2x2x1
jax: 0.10.0
libtpu: 0.0.40
codegen_flags: <defaults>
</compile_context>

<pallas_src>
import functools

import jax
import jax.numpy as jnp
from jax.experimental import pallas as pl
from jax.experimental.pallas import tpu as pltpu


_VPU_LAYER1_MAX_DIN = 16   # below this, layer 1 runs on the VPU (no MXU push)


def _round_up(x, m):
    return (x + m - 1) // m * m


def value_net_kernel(s_ref, a_ref, w1s_ref, w1a_ref, rows_ref, w2_ref, b3_ref,
                     o_ref, *, vpu_layer1, d_s, d_a):
    # rows_ref packs the small per-feature row operands: [b1; b2; w3_row].
    b1 = rows_ref[0:1, :]          # (1, Hp) f32
    b2 = rows_ref[1:2, :]          # (1, Hp) f32
    w3 = rows_ref[2:3, :]          # (1, Hp) f32

    hp = b1.shape[1]
    tb = s_ref.shape[0]

    # ---- Layer 1: relu(concat(state, action) @ W1 + b1), concat fused away.
    if vpu_layer1:
        # d_in is tiny: do it as d_in rank-1 broadcast-FMAs on the VPU and keep
        # the MXU (and its fill/drain) exclusively for layer 2.  f32 throughout
        # (exact, and v5e's VPU has no bf16 path).
        s = s_ref[...]
        a = a_ref[...]
        h1 = jnp.broadcast_to(b1, (tb, hp))
        for i in range(d_s):
            h1 = h1 + s[:, i:i + 1] * w1s_ref[i:i + 1, :]
        for j in range(d_a):
            h1 = h1 + a[:, j:j + 1] * w1a_ref[j:j + 1, :]
    else:
        # Larger d_in: two bf16 MXU matmuls sharing the same f32 accumulator.
        h1 = jnp.dot(s_ref[...].astype(jnp.bfloat16), w1s_ref[...],
                     preferred_element_type=jnp.float32)
        h1 = h1 + jnp.dot(a_ref[...].astype(jnp.bfloat16), w1a_ref[...],
                          preferred_element_type=jnp.float32)
        h1 = h1 + b1
    h1 = jnp.maximum(h1, 0.0)

    # ---- Layer 2: (tb, Hp) @ (Hp, Hp) on the MXU, bf16 inputs / f32 accum.
    h2 = jnp.dot(h1.astype(jnp.bfloat16), w2_ref[...],
                 preferred_element_type=jnp.float32) + b2
    h2 = jnp.maximum(h2, 0.0)

    # ---- Layer 3: N=1 matmul replaced by a lane reduction (XLU/VPU, f32).
    # No keepdims -> (tb,) lands lane-major, so the output store is lane-dense.
    out = jnp.sum(h2 * w3, axis=-1) + b3_ref[0, 0]
    o_ref[...] = out.reshape(o_ref.shape).astype(o_ref.dtype)


def init_value_network_params(key, num_inputs, num_actions, hidden_size, init_w=0.003):
    """nn.Linear-style init. Weights stored pre-transposed (in, out); biases (1, out)."""
    k1, k2, k3, k4, k5, k6 = jax.random.split(key, 6)
    d_in = num_inputs + num_actions

    def uniform(k, shape, bound):
        return jax.random.uniform(k, shape, jnp.float32, -bound, bound)

    bnd1 = 1.0 / jnp.sqrt(d_in)
    bnd2 = 1.0 / jnp.sqrt(hidden_size)
    w1 = uniform(k1, (d_in, hidden_size), bnd1)
    b1 = uniform(k2, (1, hidden_size), bnd1)
    w2 = uniform(k3, (hidden_size, hidden_size), bnd2)
    b2 = uniform(k4, (1, hidden_size), bnd2)
    w3 = uniform(k5, (hidden_size, 1), init_w)
    b3 = uniform(k6, (1, 1), init_w)
    return (w1, b1, w2, b2, w3, b3)


def prepare_params(params, num_inputs, num_actions, lane=128):
    """One-time, host-side parameter prep.

    * W1 split into state/action halves (fuses the concat in-kernel).
    * Hidden dim zero-padded to a lane multiple (exact no-op for the forward).
    * W2 (and W1 on the MXU path) stored as bf16; small row operands
      (b1, b2, w3-row) packed into one f32 (3, Hp) array; b3 a (1, 1) scalar.
    """
    w1, b1, w2, b2, w3, b3 = params
    h = w1.shape[1]
    hp = _round_up(h, lane)
    ph = hp - h

    vpu_layer1 = (num_inputs + num_actions) <= _VPU_LAYER1_MAX_DIN
    w1_dtype = jnp.float32 if vpu_layer1 else jnp.bfloat16

    w1s = jnp.pad(w1[:num_inputs], ((0, 0), (0, ph))).astype(w1_dtype)
    w1a = jnp.pad(w1[num_inputs:num_inputs + num_actions],
                  ((0, 0), (0, ph))).astype(w1_dtype)
    rows = jnp.concatenate(
        [jnp.pad(b1, ((0, 0), (0, ph))),
         jnp.pad(b2, ((0, 0), (0, ph))),
         jnp.pad(w3.T, ((0, 0), (0, ph)))], axis=0).astype(jnp.float32)   # (3, Hp)
    w2p = jnp.pad(w2, ((0, ph), (0, ph))).astype(jnp.bfloat16)            # (Hp, Hp)
    b3p = b3.reshape(1, 1).astype(jnp.float32)                            # (1, 1) SMEM
    return (w1s, w1a, rows, w2p, b3p)


def _choose_batch_tiling(b, block_b):
    """Returns (tb, padded_batch, num_tiles)."""
    if b < 128:
        # Tiny (eval-size) batches: one full block, no padding.
        return b, b, 1
    if b <= 2 * block_b:
        # Mid batches: exactly 2 grid steps so a "parallel" 1-D grid spans both
        # TensorCores on v7x; 8-row alignment keeps blocks sublane-legal.
        tb = _round_up(pl.cdiv(b, 2), 8)
        return tb, 2 * tb, 2
    # Large batches: block_b-row tiles, even step count for megacore balance.
    tb = block_b
    nt = pl.cdiv(b, tb)
    if nt % 2 == 1:
        nt += 1
    return tb, nt * tb, nt


def value_network_forward(state, action, prepared, *, block_b=1024):
    """Pallas forward. `prepared` comes from prepare_params."""
    w1s, w1a, rows, w2, b3 = prepared
    b, d_s = state.shape
    d_a = action.shape[1]
    hp = w2.shape[1]
    vpu_layer1 = (d_s + d_a) <= _VPU_LAYER1_MAX_DIN

    tb, bp, nt = _choose_batch_tiling(b, block_b)
    if bp != b:
        state = jnp.pad(state, ((0, bp - b), (0, 0)))
        action = jnp.pad(action, ((0, bp - b), (0, 0)))

    kernel = functools.partial(value_net_kernel, vpu_layer1=vpu_layer1,
                               d_s=d_s, d_a=d_a)

    row_map = lambda i: (i, 0)
    const2 = lambda i: (0, 0)
    out_map = lambda i: (i, 0, 0)

    # VMEM budget (explicit: v5e's default scoped limit is only 16 MiB), capped
    # at v7x's 64 MiB physical VMEM.
    nbytes = lambda a: a.size * a.dtype.itemsize
    w_bytes = nbytes(w1s) + nbytes(w1a) + nbytes(rows) + nbytes(w2)
    io_bytes = 2 * 2 * tb * (d_s + d_a) * 4 + 2 * tb * 4     # double-buffered I/O tiles
    act_bytes = 2 * tb * hp * 4 + tb * hp * 2                # h1/h2 f32 + h1 bf16
    vmem_limit = int(min(64 << 20, max(32 << 20,
                                       2 * (2 * w_bytes + io_bytes + act_bytes))))

    flops = 2 * bp * hp * (d_s + d_a + hp + 1)
    bytes_accessed = (bp * (d_s + d_a) * 4 + bp * 4 + w_bytes)

    def run(single_buffer_weights):
        wkw = dict(pipeline_mode=pl.Buffered(1)) if single_buffer_weights else {}
        in_specs = [
            pl.BlockSpec((tb, d_s), row_map),                 # state tile
            pl.BlockSpec((tb, d_a), row_map),                 # action tile
            pl.BlockSpec((d_s, hp), const2, **wkw),           # W1_s (VMEM-resident)
            pl.BlockSpec((d_a, hp), const2, **wkw),           # W1_a (VMEM-resident)
            pl.BlockSpec((3, hp), const2, **wkw),             # [b1; b2; w3_row]
            pl.BlockSpec((hp, hp), const2, **wkw),            # W2 bf16 (VMEM-resident)
            pl.BlockSpec((1, 1), const2,
                         memory_space=pltpu.MemorySpace.SMEM),  # b3 scalar
        ]
        out = pl.pallas_call(
            kernel,
            out_shape=jax.ShapeDtypeStruct((nt, 1, tb), jnp.float32),
            grid=(nt,),
            in_specs=in_specs,
            out_specs=pl.BlockSpec((1, 1, tb), out_map),      # lane-dense output row
            compiler_params=pltpu.CompilerParams(
                dimension_semantics=("parallel",),
                vmem_limit_bytes=vmem_limit,
            ),
            cost_estimate=pl.CostEstimate(
                flops=flops, transcendentals=0, bytes_accessed=bytes_accessed),
        )(state, action, w1s, w1a, rows, w2, b3)
        return jax.block_until_ready(out)

    try:
        out = run(True)
    except Exception:
        # Fallback for JAX versions where pipeline_mode=pl.Buffered(1) is not
        # accepted for the primary pallas_call pipeline.
        out = run(False)

    return out.reshape(bp, 1)[:b]


def value_network_ref(state, action, params):
    """Pure-JAX f32 reference on the original (unpadded, fused-W1) parameters."""
    w1, b1, w2, b2, w3, b3 = params
    x = jnp.concatenate([state, action], axis=1)
    x = jnp.maximum(x @ w1 + b1, 0.0)
    x = jnp.maximum(x @ w2 + b2, 0.0)
    return x @ w3 + b3


if __name__ == "__main__":
    key = jax.random.PRNGKey(0)
    k_params, k_state, k_action = jax.random.split(key, 3)

    batch = 2
    num_inputs = 4
    num_actions = 2
    hidden_size = 32

    params = init_value_network_params(k_params, num_inputs, num_actions, hidden_size)
    prepared = prepare_params(params, num_inputs, num_actions)

    state = jax.random.normal(k_state, (batch, num_inputs), jnp.float32)
    action = jax.random.normal(k_action, (batch, num_actions), jnp.float32)

    out = value_network_forward(state, action, prepared)
    out = jax.block_until_ready(out)

    ref = value_network_ref(state, action, params)
    assert out.shape == (batch, 1), out.shape
    # bf16 MXU feeds with f32 accumulation: tolerance loosened vs the f32 ref.
    assert jnp.allclose(out, ref, atol=1e-2, rtol=1e-2), (out, ref)

    print("KERNEL_OK")
</pallas_src>

<mosaic_0001>
module attributes {stable_mosaic.version = 11 : i64} {
  func.func @value_net_kernel(%arg0: i32, %arg1: memref<2x4xf32, #tpu.memory_space<vmem>>, %arg2: memref<2x2xf32, #tpu.memory_space<vmem>>, %arg3: memref<4x128xf32, #tpu.memory_space<vmem>>, %arg4: memref<2x128xf32, #tpu.memory_space<vmem>>, %arg5: memref<3x128xf32, #tpu.memory_space<vmem>>, %arg6: memref<128x128xbf16, #tpu.memory_space<vmem>>, %arg7: memref<1x1xf32, #tpu.memory_space<smem>>, %arg8: memref<1x1x2xf32, #tpu.memory_space<vmem>>) attributes {dimension_semantics = [#tpu.dimension_semantics<parallel>], iteration_bounds = array<i64: 1>, scalar_prefetch = 0 : i64, scratch_operands = 0 : i64, tpu.core_type = #tpu.core_type<tc>, window_params = [{transform_indices = @transform_0, window_bounds = array<i64: 2, 4>}, {transform_indices = @transform_1, window_bounds = array<i64: 2, 2>}, {pipeline_mode = #tpu.pipeline_mode<synchronous>, transform_indices = @transform_2, window_bounds = array<i64: 4, 128>}, {pipeline_mode = #tpu.pipeline_mode<synchronous>, transform_indices = @transform_3, window_bounds = array<i64: 2, 128>}, {pipeline_mode = #tpu.pipeline_mode<synchronous>, transform_indices = @transform_4, window_bounds = array<i64: 3, 128>}, {pipeline_mode = #tpu.pipeline_mode<synchronous>, transform_indices = @transform_5, window_bounds = array<i64: 128, 128>}, {transform_indices = @transform_6, window_bounds = array<i64: 1, 1>}, {transform_indices = @transform_7, window_bounds = array<i64: 1, 1, 2>}]} {
    %c0 = arith.constant 0 : index
    %c0_0 = arith.constant 0 : index
    %0 = vector.load %arg5[%c0, %c0_0] : memref<3x128xf32, #tpu.memory_space<vmem>>, vector<1x128xf32>
    %c1 = arith.constant 1 : index
    %c0_1 = arith.constant 0 : index
    %1 = vector.load %arg5[%c1, %c0_1] : memref<3x128xf32, #tpu.memory_space<vmem>>, vector<1x128xf32>
    %c2 = arith.constant 2 : index
    %c0_2 = arith.constant 0 : index
    %2 = vector.load %arg5[%c2, %c0_2] : memref<3x128xf32, #tpu.memory_space<vmem>>, vector<1x128xf32>
    %c0_3 = arith.constant 0 : index
    %c0_4 = arith.constant 0 : index
    %3 = vector.load %arg1[%c0_3, %c0_4] : memref<2x4xf32, #tpu.memory_space<vmem>>, vector<2x4xf32>
    %c0_5 = arith.constant 0 : index
    %c0_6 = arith.constant 0 : index
    %4 = vector.load %arg2[%c0_5, %c0_6] : memref<2x2xf32, #tpu.memory_space<vmem>>, vector<2x2xf32>
    %5 = vector.shape_cast %0 : vector<1x128xf32> to vector<1x128xf32>
    %6 = vector.broadcast %5 : vector<1x128xf32> to vector<2x128xf32>
    %7 = vector.extract_strided_slice %3 {offsets = [0, 0], sizes = [2, 1], strides = [1, 1]} : vector<2x4xf32> to vector<2x1xf32>
    %c0_7 = arith.constant 0 : index
    %c0_8 = arith.constant 0 : index
    %8 = vector.load %arg3[%c0_7, %c0_8] : memref<4x128xf32, #tpu.memory_space<vmem>>, vector<1x128xf32>
    %9 = vector.broadcast %7 : vector<2x1xf32> to vector<2x128xf32>
    %10 = vector.broadcast %8 : vector<1x128xf32> to vector<2x128xf32>
    %11 = arith.mulf %9, %10 : vector<2x128xf32>
    %12 = arith.addf %6, %11 : vector<2x128xf32>
    %13 = vector.extract_strided_slice %3 {offsets = [0, 1], sizes = [2, 1], strides = [1, 1]} : vector<2x4xf32> to vector<2x1xf32>
    %c1_9 = arith.constant 1 : index
    %c0_10 = arith.constant 0 : index
    %14 = vector.load %arg3[%c1_9, %c0_10] : memref<4x128xf32, #tpu.memory_space<vmem>>, vector<1x128xf32>
    %15 = vector.broadcast %13 : vector<2x1xf32> to vector<2x128xf32>
    %16 = vector.broadcast %14 : vector<1x128xf32> to vector<2x128xf32>
    %17 = arith.mulf %15, %16 : vector<2x128xf32>
    %18 = arith.addf %12, %17 : vector<2x128xf32>
    %19 = vector.extract_strided_slice %3 {offsets = [0, 2], sizes = [2, 1], strides = [1, 1]} : vector<2x4xf32> to vector<2x1xf32>
    %c2_11 = arith.constant 2 : index
    %c0_12 = arith.constant 0 : index
    %20 = vector.load %arg3[%c2_11, %c0_12] : memref<4x128xf32, #tpu.memory_space<vmem>>, vector<1x128xf32>
    %21 = vector.broadcast %19 : vector<2x1xf32> to vector<2x128xf32>
    %22 = vector.broadcast %20 : vector<1x128xf32> to vector<2x128xf32>
    %23 = arith.mulf %21, %22 : vector<2x128xf32>
    %24 = arith.addf %18, %23 : vector<2x128xf32>
    %25 = vector.extract_strided_slice %3 {offsets = [0, 3], sizes = [2, 1], strides = [1, 1]} : vector<2x4xf32> to vector<2x1xf32>
    %c3 = arith.constant 3 : index
    %c0_13 = arith.constant 0 : index
    %26 = vector.load %arg3[%c3, %c0_13] : memref<4x128xf32, #tpu.memory_space<vmem>>, vector<1x128xf32>
    %27 = vector.broadcast %25 : vector<2x1xf32> to vector<2x128xf32>
    %28 = vector.broadcast %26 : vector<1x128xf32> to vector<2x128xf32>
    %29 = arith.mulf %27, %28 : vector<2x128xf32>
    %30 = arith.addf %24, %29 : vector<2x128xf32>
    %31 = vector.extract_strided_slice %4 {offsets = [0, 0], sizes = [2, 1], strides = [1, 1]} : vector<2x2xf32> to vector<2x1xf32>
    %c0_14 = arith.constant 0 : index
    %c0_15 = arith.constant 0 : index
    %32 = vector.load %arg4[%c0_14, %c0_15] : memref<2x128xf32, #tpu.memory_space<vmem>>, vector<1x128xf32>
    %33 = vector.broadcast %31 : vector<2x1xf32> to vector<2x128xf32>
    %34 = vector.broadcast %32 : vector<1x128xf32> to vector<2x128xf32>
    %35 = arith.mulf %33, %34 : vector<2x128xf32>
    %36 = arith.addf %30, %35 : vector<2x128xf32>
    %37 = vector.extract_strided_slice %4 {offsets = [0, 1], sizes = [2, 1], strides = [1, 1]} : vector<2x2xf32> to vector<2x1xf32>
    %c1_16 = arith.constant 1 : index
    %c0_17 = arith.constant 0 : index
    %38 = vector.load %arg4[%c1_16, %c0_17] : memref<2x128xf32, #tpu.memory_space<vmem>>, vector<1x128xf32>
    %39 = vector.broadcast %37 : vector<2x1xf32> to vector<2x128xf32>
    %40 = vector.broadcast %38 : vector<1x128xf32> to vector<2x128xf32>
    %41 = arith.mulf %39, %40 : vector<2x128xf32>
    %42 = arith.addf %36, %41 : vector<2x128xf32>
    %cst = arith.constant 0.000000e+00 : f32
    %43 = vector.broadcast %cst : f32 to vector<2x128xf32>
    %44 = arith.maximumf %42, %43 : vector<2x128xf32>
    %45 = arith.truncf %44 : vector<2x128xf32> to vector<2x128xbf16>
    %c0_18 = arith.constant 0 : index
    %c0_19 = arith.constant 0 : index
    %46 = vector.load %arg6[%c0_18, %c0_19] : memref<128x128xbf16, #tpu.memory_space<vmem>>, vector<128x128xbf16>
    %cst_20 = arith.constant dense<0.000000e+00> : vector<2x128xf32>
    %47 = tpu.matmul %45, %46, %cst_20 {dimension_numbers = #tpu.dot_dimension_numbers<[1], [0], [0], [1], [0, 0, 1, 1], [], []>} : vector<2x128xbf16>, vector<128x128xbf16>, vector<2x128xf32> -> vector<2x128xf32>
    %48 = vector.broadcast %1 : vector<1x128xf32> to vector<2x128xf32>
    %49 = arith.addf %47, %48 : vector<2x128xf32>
    %cst_21 = arith.constant 0.000000e+00 : f32
    %50 = vector.broadcast %cst_21 : f32 to vector<2x128xf32>
    %51 = arith.maximumf %49, %50 : vector<2x128xf32>
    %52 = vector.broadcast %2 : vector<1x128xf32> to vector<2x128xf32>
    %53 = arith.mulf %51, %52 : vector<2x128xf32>
    %cst_22 = arith.constant dense<0.000000e+00> : vector<2xf32>
    %54 = vector.multi_reduction <add>, %53, %cst_22 [1] : vector<2x128xf32> to vector<2xf32>
    %c0_23 = arith.constant 0 : index
    %c0_24 = arith.constant 0 : index
    %55 = memref.load %arg7[%c0_23, %c0_24] : memref<1x1xf32, #tpu.memory_space<smem>>
    %56 = vector.broadcast %55 : f32 to vector<2xf32>
    %57 = arith.addf %54, %56 : vector<2xf32>
    %58 = vector.shape_cast %57 : vector<2xf32> to vector<1x1x2xf32>
    %c0_25 = arith.constant 0 : index
    %c0_26 = arith.constant 0 : index
    %c0_27 = arith.constant 0 : index
    %59 = vector.load %arg8[%c0_25, %c0_26, %c0_27] : memref<1x1x2xf32, #tpu.memory_space<vmem>>, vector<1x1x2xf32>
    tpu.vector_store %arg8[%c0_25, %c0_26, %c0_27], %58 {strides = array<i32>} : memref<1x1x2xf32, #tpu.memory_space<vmem>>, vector<1x1x2xf32>,
    return
  }
  func.func @transform_0(%arg0: i32) -> (i32, i32) {
    %c0_i32 = arith.constant 0 : i32
    %c0_i32_0 = arith.constant 0 : i32
    return %arg0, %c0_i32 : i32, i32
  }
  func.func @transform_1(%arg0: i32) -> (i32, i32) {
    %c0_i32 = arith.constant 0 : i32
    %c0_i32_0 = arith.constant 0 : i32
    return %arg0, %c0_i32 : i32, i32
  }
  func.func @transform_2(%arg0: i32) -> (i32, i32) {
    %c0_i32 = arith.constant 0 : i32
    %c0_i32_0 = arith.constant 0 : i32
    %c0_i32_1 = arith.constant 0 : i32
    return %c0_i32, %c0_i32_0 : i32, i32
  }
  func.func @transform_3(%arg0: i32) -> (i32, i32) {
    %c0_i32 = arith.constant 0 : i32
    %c0_i32_0 = arith.constant 0 : i32
    %c0_i32_1 = arith.constant 0 : i32
    return %c0_i32, %c0_i32_0 : i32, i32
  }
  func.func @transform_4(%arg0: i32) -> (i32, i32) {
    %c0_i32 = arith.constant 0 : i32
    %c0_i32_0 = arith.constant 0 : i32
    %c0_i32_1 = arith.constant 0 : i32
    return %c0_i32, %c0_i32_0 : i32, i32
  }
  func.func @transform_5(%arg0: i32) -> (i32, i32) {
    %c0_i32 = arith.constant 0 : i32
    %c0_i32_0 = arith.constant 0 : i32
    %c0_i32_1 = arith.constant 0 : i32
    return %c0_i32, %c0_i32_0 : i32, i32
  }
  func.func @transform_6(%arg0: i32) -> (i32, i32) {
    %c0_i32 = arith.constant 0 : i32
    %c0_i32_0 = arith.constant 0 : i32
    %c0_i32_1 = arith.constant 0 : i32
    return %c0_i32, %c0_i32_0 : i32, i32
  }
  func.func @transform_7(%arg0: i32) -> (i32, i32, i32) {
    %c0_i32 = arith.constant 0 : i32
    %c0_i32_0 = arith.constant 0 : i32
    %c0_i32_1 = arith.constant 0 : i32
    return %arg0, %c0_i32, %c0_i32_0 : i32, i32, i32
  }
}

module attributes {stable_mosaic.version = 11 : i64} {
  func.func @value_net_kernel(%arg0: i32, %arg1: memref<2x4xf32, #tpu.memory_space<vmem>>, %arg2: memref<2x2xf32, #tpu.memory_space<vmem>>, %arg3: memref<4x128xf32, #tpu.memory_space<vmem>>, %arg4: memref<2x128xf32, #tpu.memory_space<vmem>>, %arg5: memref<3x128xf32, #tpu.memory_space<vmem>>, %arg6: memref<128x128xbf16, #tpu.memory_space<vmem>>, %arg7: memref<1x1xf32, #tpu.memory_space<smem>>, %arg8: memref<1x1x2xf32, #tpu.memory_space<vmem>>) attributes {dimension_semantics = [#tpu.dimension_semantics<parallel>], iteration_bounds = array<i64: 1>, scalar_prefetch = 0 : i64, scratch_operands = 0 : i64, tpu.core_type = #tpu.core_type<tc>, window_params = [{transform_indices = @transform_0, window_bounds = array<i64: 2, 4>}, {transform_indices = @transform_1, window_bounds = array<i64: 2, 2>}, {pipeline_mode = #tpu.pipeline_mode<synchronous>, transform_indices = @transform_2, window_bounds = array<i64: 4, 128>}, {pipeline_mode = #tpu.pipeline_mode<synchronous>, transform_indices = @transform_3, window_bounds = array<i64: 2, 128>}, {pipeline_mode = #tpu.pipeline_mode<synchronous>, transform_indices = @transform_4, window_bounds = array<i64: 3, 128>}, {pipeline_mode = #tpu.pipeline_mode<synchronous>, transform_indices = @transform_5, window_bounds = array<i64: 128, 128>}, {transform_indices = @transform_6, window_bounds = array<i64: 1, 1>}, {transform_indices = @transform_7, window_bounds = array<i64: 1, 1, 2>}]} {
    %c0 = arith.constant 0 : index
    %c0_0 = arith.constant 0 : index
    %0 = vector.load %arg5[%c0, %c0_0] : memref<3x128xf32, #tpu.memory_space<vmem>>, vector<1x128xf32>
    %c1 = arith.constant 1 : index
    %c0_1 = arith.constant 0 : index
    %1 = vector.load %arg5[%c1, %c0_1] : memref<3x128xf32, #tpu.memory_space<vmem>>, vector<1x128xf32>
    %c2 = arith.constant 2 : index
    %c0_2 = arith.constant 0 : index
    %2 = vector.load %arg5[%c2, %c0_2] : memref<3x128xf32, #tpu.memory_space<vmem>>, vector<1x128xf32>
    %c0_3 = arith.constant 0 : index
    %c0_4 = arith.constant 0 : index
    %3 = vector.load %arg1[%c0_3, %c0_4] : memref<2x4xf32, #tpu.memory_space<vmem>>, vector<2x4xf32>
    %c0_5 = arith.constant 0 : index
    %c0_6 = arith.constant 0 : index
    %4 = vector.load %arg2[%c0_5, %c0_6] : memref<2x2xf32, #tpu.memory_space<vmem>>, vector<2x2xf32>
    %5 = vector.shape_cast %0 : vector<1x128xf32> to vector<1x128xf32>
    %6 = vector.broadcast %5 : vector<1x128xf32> to vector<2x128xf32>
    %7 = vector.extract_strided_slice %3 {offsets = [0, 0], sizes = [2, 1], strides = [1, 1]} : vector<2x4xf32> to vector<2x1xf32>
    %c0_7 = arith.constant 0 : index
    %c0_8 = arith.constant 0 : index
    %8 = vector.load %arg3[%c0_7, %c0_8] : memref<4x128xf32, #tpu.memory_space<vmem>>, vector<1x128xf32>
    %9 = vector.broadcast %7 : vector<2x1xf32> to vector<2x128xf32>
    %10 = vector.broadcast %8 : vector<1x128xf32> to vector<2x128xf32>
    %11 = arith.mulf %9, %10 : vector<2x128xf32>
    %12 = arith.addf %6, %11 : vector<2x128xf32>
    %13 = vector.extract_strided_slice %3 {offsets = [0, 1], sizes = [2, 1], strides = [1, 1]} : vector<2x4xf32> to vector<2x1xf32>
    %c1_9 = arith.constant 1 : index
    %c0_10 = arith.constant 0 : index
    %14 = vector.load %arg3[%c1_9, %c0_10] : memref<4x128xf32, #tpu.memory_space<vmem>>, vector<1x128xf32>
    %15 = vector.broadcast %13 : vector<2x1xf32> to vector<2x128xf32>
    %16 = vector.broadcast %14 : vector<1x128xf32> to vector<2x128xf32>
    %17 = arith.mulf %15, %16 : vector<2x128xf32>
    %18 = arith.addf %12, %17 : vector<2x128xf32>
    %19 = vector.extract_strided_slice %3 {offsets = [0, 2], sizes = [2, 1], strides = [1, 1]} : vector<2x4xf32> to vector<2x1xf32>
    %c2_11 = arith.constant 2 : index
    %c0_12 = arith.constant 0 : index
    %20 = vector.load %arg3[%c2_11, %c0_12] : memref<4x128xf32, #tpu.memory_space<vmem>>, vector<1x128xf32>
    %21 = vector.broadcast %19 : vector<2x1xf32> to vector<2x128xf32>
    %22 = vector.broadcast %20 : vector<1x128xf32> to vector<2x128xf32>
    %23 = arith.mulf %21, %22 : vector<2x128xf32>
    %24 = arith.addf %18, %23 : vector<2x128xf32>
    %25 = vector.extract_strided_slice %3 {offsets = [0, 3], sizes = [2, 1], strides = [1, 1]} : vector<2x4xf32> to vector<2x1xf32>
    %c3 = arith.constant 3 : index
    %c0_13 = arith.constant 0 : index
    %26 = vector.load %arg3[%c3, %c0_13] : memref<4x128xf32, #tpu.memory_space<vmem>>, vector<1x128xf32>
    %27 = vector.broadcast %25 : vector<2x1xf32> to vector<2x128xf32>
    %28 = vector.broadcast %26 : vector<1x128xf32> to vector<2x128xf32>
    %29 = arith.mulf %27, %28 : vector<2x128xf32>
    %30 = arith.addf %24, %29 : vector<2x128xf32>
    %31 = vector.extract_strided_slice %4 {offsets = [0, 0], sizes = [2, 1], strides = [1, 1]} : vector<2x2xf32> to vector<2x1xf32>
    %c0_14 = arith.constant 0 : index
    %c0_15 = arith.constant 0 : index
    %32 = vector.load %arg4[%c0_14, %c0_15] : memref<2x128xf32, #tpu.memory_space<vmem>>, vector<1x128xf32>
    %33 = vector.broadcast %31 : vector<2x1xf32> to vector<2x128xf32>
    %34 = vector.broadcast %32 : vector<1x128xf32> to vector<2x128xf32>
    %35 = arith.mulf %33, %34 : vector<2x128xf32>
    %36 = arith.addf %30, %35 : vector<2x128xf32>
    %37 = vector.extract_strided_slice %4 {offsets = [0, 1], sizes = [2, 1], strides = [1, 1]} : vector<2x2xf32> to vector<2x1xf32>
    %c1_16 = arith.constant 1 : index
    %c0_17 = arith.constant 0 : index
    %38 = vector.load %arg4[%c1_16, %c0_17] : memref<2x128xf32, #tpu.memory_space<vmem>>, vector<1x128xf32>
    %39 = vector.broadcast %37 : vector<2x1xf32> to vector<2x128xf32>
    %40 = vector.broadcast %38 : vector<1x128xf32> to vector<2x128xf32>
    %41 = arith.mulf %39, %40 : vector<2x128xf32>
    %42 = arith.addf %36, %41 : vector<2x128xf32>
    %cst = arith.constant 0.000000e+00 : f32
    %43 = vector.broadcast %cst : f32 to vector<2x128xf32>
    %44 = arith.maximumf %42, %43 : vector<2x128xf32>
    %45 = arith.truncf %44 : vector<2x128xf32> to vector<2x128xbf16>
    %c0_18 = arith.constant 0 : index
    %c0_19 = arith.constant 0 : index
    %46 = vector.load %arg6[%c0_18, %c0_19] : memref<128x128xbf16, #tpu.memory_space<vmem>>, vector<128x128xbf16>
    %cst_20 = arith.constant dense<0.000000e+00> : vector<2x128xf32>
    %47 = tpu.matmul %45, %46, %cst_20 {dimension_numbers = #tpu.dot_dimension_numbers<[1], [0], [0], [1], [0, 0, 1, 1], [], []>} : vector<2x128xbf16>, vector<128x128xbf16>, vector<2x128xf32> -> vector<2x128xf32>
    %48 = vector.broadcast %1 : vector<1x128xf32> to vector<2x128xf32>
    %49 = arith.addf %47, %48 : vector<2x128xf32>
    %cst_21 = arith.constant 0.000000e+00 : f32
    %50 = vector.broadcast %cst_21 : f32 to vector<2x128xf32>
    %51 = arith.maximumf %49, %50 : vector<2x128xf32>
    %52 = vector.broadcast %2 : vector<1x128xf32> to vector<2x128xf32>
    %53 = arith.mulf %51, %52 : vector<2x128xf32>
    %cst_22 = arith.constant dense<0.000000e+00> : vector<2xf32>
    %54 = vector.multi_reduction <add>, %53, %cst_22 [1] : vector<2x128xf32> to vector<2xf32>
    %c0_23 = arith.constant 0 : index
    %c0_24 = arith.constant 0 : index
    %55 = memref.load %arg7[%c0_23, %c0_24] : memref<1x1xf32, #tpu.memory_space<smem>>
    %56 = vector.broadcast %55 : f32 to vector<2xf32>
    %57 = arith.addf %54, %56 : vector<2xf32>
    %58 = vector.shape_cast %57 : vector<2xf32> to vector<1x1x2xf32>
    %c0_25 = arith.constant 0 : index
    %c0_26 = arith.constant 0 : index
    %c0_27 = arith.constant 0 : index
    %59 = vector.load %arg8[%c0_25, %c0_26, %c0_27] : memref<1x1x2xf32, #tpu.memory_space<vmem>>, vector<1x1x2xf32>
    tpu.vector_store %arg8[%c0_25, %c0_26, %c0_27], %58 {strides = array<i32>} : memref<1x1x2xf32, #tpu.memory_space<vmem>>, vector<1x1x2xf32>,
    return
  }
  func.func @transform_0(%arg0: i32) -> (i32, i32) {
    %c0_i32 = arith.constant 0 : i32
    %c0_i32_0 = arith.constant 0 : i32
    return %arg0, %c0_i32 : i32, i32
  }
  func.func @transform_1(%arg0: i32) -> (i32, i32) {
    %c0_i32 = arith.constant 0 : i32
    %c0_i32_0 = arith.constant 0 : i32
    return %arg0, %c0_i32 : i32, i32
  }
  func.func @transform_2(%arg0: i32) -> (i32, i32) {
    %c0_i32 = arith.constant 0 : i32
    %c0_i32_0 = arith.constant 0 : i32
    %c0_i32_1 = arith.constant 0 : i32
    return %c0_i32, %c0_i32_0 : i32, i32
  }
  func.func @transform_3(%arg0: i32) -> (i32, i32) {
    %c0_i32 = arith.constant 0 : i32
    %c0_i32_0 = arith.constant 0 : i32
    %c0_i32_1 = arith.constant 0 : i32
    return %c0_i32, %c0_i32_0 : i32, i32
  }
  func.func @transform_4(%arg0: i32) -> (i32, i32) {
    %c0_i32 = arith.constant 0 : i32
    %c0_i32_0 = arith.constant 0 : i32
    %c0_i32_1 = arith.constant 0 : i32
    return %c0_i32, %c0_i32_0 : i32, i32
  }
  func.func @transform_5(%arg0: i32) -> (i32, i32) {
    %c0_i32 = arith.constant 0 : i32
    %c0_i32_0 = arith.constant 0 : i32
    %c0_i32_1 = arith.constant 0 : i32
    return %c0_i32, %c0_i32_0 : i32, i32
  }
  func.func @transform_6(%arg0: i32) -> (i32, i32) {
    %c0_i32 = arith.constant 0 : i32
    %c0_i32_0 = arith.constant 0 : i32
    %c0_i32_1 = arith.constant 0 : i32
    return %c0_i32, %c0_i32_0 : i32, i32
  }
  func.func @transform_7(%arg0: i32) -> (i32, i32, i32) {
    %c0_i32 = arith.constant 0 : i32
    %c0_i32_0 = arith.constant 0 : i32
    %c0_i32_1 = arith.constant 0 : i32
    return %arg0, %c0_i32, %c0_i32_0 : i32, i32, i32
  }
}

</mosaic_0001>

<llo_original>
// kernel: tpu_custom_call.1
$region0: #{tpu_custom_call.1}
  #allocation0 [shape = 'u32[]', space=smem, size = 0x4, offset = 0x4, fixed_abs, tag = 'smem constant byte address 0x4 - core index']
  #allocation1 [shape = 'u32[144,128]{1,0:T(1,128)}', space=vmem, size = 0x12000, scoped, tag = 'internal scratch']
  #allocation2 [shape = 'f32[1,1]{1,0:T(1,128)S(6)}', space=smem, size = 0x200, scoped, tag = 'scoped memory for tpu_custom_call.1']
  %s0 = inlined_call_operand.vmem [shape: f32[2,4], index: 0, kind: input, shape index: {}]
  %s1 = inlined_call_operand.hbm [shape: f32[2,2], index: 1, kind: input, shape index: {}]
  %s2 = inlined_call_operand.vmem [shape: f32[4,128], index: 2, kind: input, shape index: {}]
  %s3 = inlined_call_operand.vmem [shape: f32[2,128], index: 3, kind: input, shape index: {}]
  %s4 = inlined_call_operand.vmem [shape: f32[3,128], index: 4, kind: input, shape index: {}]
  %s5 = inlined_call_operand.hbm [shape: bf16[128,128], index: 5, kind: input, shape index: {}]
  %s6 = inlined_call_operand.<no memory space> [shape: f32[1,1], index: 6, kind: input, shape index: {}]
  %s7 = inlined_call_operand.hbm [shape: f32[1,1,2], index: 7, kind: output, shape index: {}]
  %s8 = sld [smem:[#allocation0]]
  $region46: #{tpu_custom_call.1} parent=0
    _
  %s10 = ssub.s32 1, %s8
  %s11 = scalar_select 0, %s10, %s8
  %12 = sst [smem:[#allocation2]] %s6
  $region1: #{tpu_custom_call.1} parent=0
    #allocation3 [shape = 'u8[1024]{0}', space=vmem, size = 0x400, scoped, tag = 'input window, operand 1, single buffered']
    #allocation4 [shape = 's32[1]{0}', space=sflag, size = 0x4, scoped, tag = 'scoped memory for tpu_custom_call.1']
    #allocation5 [shape = 's32[1]{0}', space=sflag, size = 0x4, scoped, tag = 'scoped memory for tpu_custom_call.1']
    #allocation6 [shape = 'u8[32768]{0}', space=vmem, size = 0x8000, scoped, tag = 'input window, operand 5, single buffered']
    #allocation7 [shape = 's32[1]{0}', space=sflag, size = 0x4, scoped, tag = 'scoped memory for tpu_custom_call.1']
    #allocation8 [shape = 'u8[512]{0}', space=vmem, size = 0x400, scoped, tag = 'output window, operand 0, single buffered']
    %13 = vsyncpa [#allocation4], 0
    %14 = vsyncpa [#allocation7], 0
    %15 = vsyncpa [#allocation5], 0
    // Predicated region
    $region2: #{tpu_custom_call.1} parent=1 // pred_check
      _
    $region3: #{tpu_custom_call.1} parent=1 // pred_check_branch
      %17 = sbr.rel (0) target = $region5
    $region4: #{tpu_custom_call.1} parent=1 // pred_region
      _
    $region5: #{tpu_custom_call.1} parent=1 // pred_fallthru
      _
    // Predicated region
    $region6: #{tpu_custom_call.1} parent=1 // pred_check
      _
    $region7: #{tpu_custom_call.1} parent=1 // pred_check_branch
      %19 = sbr.rel (0) target = $region9
    $region8: #{tpu_custom_call.1} parent=1 // pred_region
      %s21 = ssub.s32 32, 32
      %22 = vsyncadd [#allocation4], %s21
      %s24 = sshll.u32 [#allocation3], 4
      %s25 = int_to_ptr.vmem [resolvable:$true] %s24
      %27 = dma.hbm_to_vmem [thread:$0]  %s1, 32, %s25, [#allocation4]
    $region9: #{tpu_custom_call.1} parent=1 // pred_fallthru
      _
    // Predicated region
    $region10: #{tpu_custom_call.1} parent=1 // pred_check
      _
    $region11: #{tpu_custom_call.1} parent=1 // pred_check_branch
      %29 = sbr.rel (0) target = $region13
    $region12: #{tpu_custom_call.1} parent=1 // pred_region
      _
    $region13: #{tpu_custom_call.1} parent=1 // pred_fallthru
      _
    // Predicated region
    $region14: #{tpu_custom_call.1} parent=1 // pred_check
      _
    $region15: #{tpu_custom_call.1} parent=1 // pred_check_branch
      %31 = sbr.rel (0) target = $region17
    $region16: #{tpu_custom_call.1} parent=1 // pred_region
      _
    $region17: #{tpu_custom_call.1} parent=1 // pred_fallthru
      _
    // Predicated region
    $region18: #{tpu_custom_call.1} parent=1 // pred_check
      _
    $region19: #{tpu_custom_call.1} parent=1 // pred_check_branch
      %33 = sbr.rel (0) target = $region21
    $region20: #{tpu_custom_call.1} parent=1 // pred_region
      _
    $region21: #{tpu_custom_call.1} parent=1 // pred_fallthru
      _
    // Predicated region
    $region22: #{tpu_custom_call.1} parent=1 // pred_check
      _
    $region23: #{tpu_custom_call.1} parent=1 // pred_check_branch
      %35 = sbr.rel (0) target = $region25
    $region24: #{tpu_custom_call.1} parent=1 // pred_region
      %s37 = ssub.s32 1024, 1024
      %38 = vsyncadd [#allocation7], %s37
      %s39 = sshll.u32 [#allocation6], 4
      %s40 = int_to_ptr.vmem [resolvable:$true] %s39
      %45 = dma.hbm_to_vmem [thread:$0]  %s5, 1024, %s40, [#allocation7], 64, 64, 4
    $region25: #{tpu_custom_call.1} parent=1 // pred_fallthru
      _
    // Predicated region
    $region26: #{tpu_custom_call.1} parent=1 // pred_check
      _
    $region27: #{tpu_custom_call.1} parent=1 // pred_check_branch
      %47 = sbr.rel (0) target = $region29
    $region28: #{tpu_custom_call.1} parent=1 // pred_region
      _
    $region29: #{tpu_custom_call.1} parent=1 // pred_fallthru
      _
    // Predicated region
    $region30: #{tpu_custom_call.1} parent=1 // pred_check
      _
    $region31: #{tpu_custom_call.1} parent=1 // pred_check_branch
      %49 = sbr.rel (0) target = $region33
    $region32: #{tpu_custom_call.1} parent=1 // pred_region
      %50 = dma.done [#allocation4], 32
    $region33: #{tpu_custom_call.1} parent=1 // pred_fallthru
      _
    // Predicated region
    $region34: #{tpu_custom_call.1} parent=1 // pred_check
      _
    $region35: #{tpu_custom_call.1} parent=1 // pred_check_branch
      %52 = sbr.rel (0) target = $region37
    $region36: #{tpu_custom_call.1} parent=1 // pred_region
      %53 = dma.done [#allocation7], 1024
    $region37: #{tpu_custom_call.1} parent=1 // pred_fallthru
      _
    %v55 = vld [vmem:[%s4] sm:$0x1]
    %v56 = vld [vmem:[%s4 + $0x1] sm:$0x1]
    %v57 = vld [vmem:[%s4 + $0x2] sm:$0x1]
    %v58 = vld [vmem:[%s0] sm:$0x3]
    %v59 = vld [vmem:[#allocation3] sm:$0x3]
    %v60 = vlaneseq
    %v61 = vshrl.u32 %v60, 7
    %v62 = vsub.s32 0, %v61
    %v63 = vrot.slane %v55, %v62
    %v64 = vld [vmem:[%s2] sm:$0x1]
    %66 = vset.pattern.permute.xlu0 0
    %67 = vperm.xlu0 %66, %v58
    %v68 = vpop.permute.xlu0 %67
    %v70 = vlaneseq
    %v71 = vshrl.u32 %v70, 7
    %v72 = vsub.s32 0, %v71
    %v73 = vrot.slane %v64, %v72
    %v74 = vmul.f32 %v68, %v73
    %v75 = vadd.f32 %v63, %v74
    %v76 = vld [vmem:[%s2 + $0x1] sm:$0x1]
    %77 = vset.pattern.permute.xlu0 1
    %78 = vperm.xlu0 %77, %v58
    %v79 = vpop.permute.xlu0 %78
    %v81 = vlaneseq
    %v82 = vshrl.u32 %v81, 7
    %v83 = vsub.s32 0, %v82
    %v84 = vrot.slane %v76, %v83
    %v85 = vmul.f32 %v79, %v84
    %v86 = vadd.f32 %v75, %v85
    %v87 = vld [vmem:[%s2 + $0x2] sm:$0x1]
    %88 = vset.pattern.permute.xlu0 2
    %89 = vperm.xlu0 %88, %v58
    %v90 = vpop.permute.xlu0 %89
    %v92 = vlaneseq
    %v93 = vshrl.u32 %v92, 7
    %v94 = vsub.s32 0, %v93
    %v95 = vrot.slane %v87, %v94
    %v96 = vmul.f32 %v90, %v95
    %v97 = vadd.f32 %v86, %v96
    %v98 = vld [vmem:[%s2 + $0x3] sm:$0x1]
    %99 = vset.pattern.permute.xlu0 3
    %100 = vperm.xlu0 %99, %v58
    %v101 = vpop.permute.xlu0 %100
    %v103 = vlaneseq
    %v104 = vshrl.u32 %v103, 7
    %v105 = vsub.s32 0, %v104
    %v106 = vrot.slane %v98, %v105
    %v107 = vmul.f32 %v101, %v106
    %v108 = vadd.f32 %v97, %v107
    %v109 = vld [vmem:[%s3] sm:$0x1]
    %111 = vset.pattern.permute.xlu0 0
    %112 = vperm.xlu0 %111, %v59
    %v113 = vpop.permute.xlu0 %112
    %v115 = vlaneseq
    %v116 = vshrl.u32 %v115, 7
    %v117 = vsub.s32 0, %v116
    %v118 = vrot.slane %v109, %v117
    %v119 = vmul.f32 %v113, %v118
    %v120 = vadd.f32 %v108, %v119
    %v121 = vld [vmem:[%s3 + $0x1] sm:$0x1]
    %122 = vset.pattern.permute.xlu0 1
    %123 = vperm.xlu0 %122, %v59
    %v124 = vpop.permute.xlu0 %123
    %v126 = vlaneseq
    %v127 = vshrl.u32 %v126, 7
    %v128 = vsub.s32 0, %v127
    %v129 = vrot.slane %v121, %v128
    %v130 = vmul.f32 %v124, %v129
    %v131 = vadd.f32 %v120, %v130
    %v132 = vmax.f32 %v131, 0.0
    %v133 = vpack.c.bf16 %v132, %v132
    %v134 = vld [vmem:[#allocation6] sm:$0xf]
    %v135 = vld [vmem:[#allocation6 + $0x4] sm:$0xf]
    %v136 = vld [vmem:[#allocation6 + $0x8] sm:$0xf]
    %v137 = vld [vmem:[#allocation6 + $0xc] sm:$0xf]
    %v138 = vld [vmem:[#allocation6 + $0x10] sm:$0xf]
    %v139 = vld [vmem:[#allocation6 + $0x14] sm:$0xf]
    %v140 = vld [vmem:[#allocation6 + $0x18] sm:$0xf]
    %v141 = vld [vmem:[#allocation6 + $0x1c] sm:$0xf]
    %v142 = vld [vmem:[#allocation6 + $0x20] sm:$0xf]
    %v143 = vld [vmem:[#allocation6 + $0x24] sm:$0xf]
    %v144 = vld [vmem:[#allocation6 + $0x28] sm:$0xf]
    %v145 = vld [vmem:[#allocation6 + $0x2c] sm:$0xf]
    %v146 = vld [vmem:[#allocation6 + $0x30] sm:$0xf]
    %v147 = vld [vmem:[#allocation6 + $0x34] sm:$0xf]
    %v148 = vld [vmem:[#allocation6 + $0x38] sm:$0xf]
    %v149 = vld [vmem:[#allocation6 + $0x3c] sm:$0xf]
    %v150 = vlaneseq
    %v151 = vshrl.u32 %v150, 7
    %v152 = vsub.s32 0, %v151
    %v153 = vrot.slane %v56, %v152
    %v170 = vunpack.c.l.b16 %v134
    %v171 = vunpack.c.l.b16 %v135
    %v172 = vunpack.c.l.b16 %v136
    %v173 = vunpack.c.l.b16 %v137
    %v174 = vunpack.c.l.b16 %v138
    %v175 = vunpack.c.l.b16 %v139
    %v176 = vunpack.c.l.b16 %v140
    %v177 = vunpack.c.l.b16 %v141
    %v178 = vunpack.c.l.b16 %v142
    %v179 = vunpack.c.l.b16 %v143
    %v180 = vunpack.c.l.b16 %v144
    %v181 = vunpack.c.l.b16 %v145
    %v182 = vunpack.c.l.b16 %v146
    %v183 = vunpack.c.l.b16 %v147
    %v184 = vunpack.c.l.b16 %v148
    %v185 = vunpack.c.l.b16 %v149
    %v186 = vpack.c.b16 %v171, %v170
    %v187 = vpack.c.b16 %v173, %v172
    %v188 = vpack.c.b16 %v175, %v174
    %v189 = vpack.c.b16 %v177, %v176
    %v190 = vpack.c.b16 %v179, %v178
    %v191 = vpack.c.b16 %v181, %v180
    %v192 = vpack.c.b16 %v183, %v182
    %v193 = vpack.c.b16 %v185, %v184
    %202 = vmatprep.subr.bf16.mxu0 0
    %203 = vmatpush1.bf16.msra.mxu0 %v186
    %204 = vmatprep.subr.bf16.mxu0 0
    %205 = vmatpush1.bf16.msra.mxu0 %v187
    %206 = vmatprep.subr.bf16.mxu0 0
    %207 = vmatpush1.bf16.msra.mxu0 %v188
    %208 = vmatprep.subr.bf16.mxu0 0
    %209 = vmatpush1.bf16.msra.mxu0 %v189
    %210 = vmatprep.subr.bf16.mxu0 0
    %211 = vmatpush1.bf16.msra.mxu0 %v190
    %212 = vmatprep.subr.bf16.mxu0 0
    %213 = vmatpush1.bf16.msra.mxu0 %v191
    %214 = vmatprep.subr.bf16.mxu0 0
    %215 = vmatpush1.bf16.msra.mxu0 %v192
    %216 = vmatprep.subr.bf16.mxu0 0
    %217 = vmatpush1.bf16.msra.mxu0 %v193
    %218 = vmatprep.subr.bf16.mxu0 0
    %219 = vmatpush1.bf16.msra.mxu0 0
    %220 = vmatprep.subr.bf16.mxu0 0
    %221 = vmatpush1.bf16.msra.mxu0 0
    %222 = vmatprep.subr.bf16.mxu0 0
    %223 = vmatpush1.bf16.msra.mxu0 0
    %224 = vmatprep.subr.bf16.mxu0 0
    %225 = vmatpush1.bf16.msra.mxu0 0
    %226 = vmatprep.subr.bf16.mxu0 0
    %227 = vmatpush1.bf16.msra.mxu0 0
    %228 = vmatprep.subr.bf16.mxu0 0
    %229 = vmatpush1.bf16.msra.mxu0 0
    %230 = vmatprep.subr.bf16.mxu0 0
    %231 = vmatpush1.bf16.msra.mxu0 0
    %232 = vmatprep.subr.bf16.mxu0 0
    %233 = vmatpush1.bf16.msra.mxu0 0
    %234 = vmatprep.mubr.bf16.mxu0 0
    %235 = vmatmul.mubr.bf16.gmra.mrb[0].mxu0 %v133
    %v236 = vpop.f32.mrb[0].mxu0
    %v237 = vadd.f32 %v153, %v236
    %v238 = vpop.f32.mrb[0].mxu0
    %v239 = vpop.f32.mrb[0].mxu0
    %v240 = vpop.f32.mrb[0].mxu0
    %241 = vdwg.mxu0
    %v242 = vmax.f32 %v237, 0.0
    %v243 = vlaneseq
    %v244 = vshrl.u32 %v243, 7
    %v245 = vsub.s32 0, %v244
    %v246 = vrot.slane %v57, %v245
    %v247 = vmul.f32 %v242, %v246
    %vm248 = vcmask 1041408
    %v249 = vsel %vm248, %v247, 0.0
    %250 = vadd.xlane.f32.xlu0 %v249
    %v251 = vpop.xlane.xlu0 %250
    %s252 = sld [smem:[#allocation2]]
    %v253 = vstv %s252
    %v254 = vadd.f32 %v251, %v253
    %v256 = vlaneseq
    %v257 = vand.u32 %v256, 127
    %v258 = vlaneseq
    %v259 = vshrl.u32 %v258, 7
    %v260 = vsub.s32 %v257, %v259
    %v261 = vrot.slane %v254, %v260
    %vm263 = vcmask 8192
    %264 = vst.msk [vmem:[#allocation8] sm:$0x1] %vm263, %v261
    // Predicated region
    $region38: #{tpu_custom_call.1} parent=1 // pred_check
      _
    $region39: #{tpu_custom_call.1} parent=1 // pred_check_branch
      %266 = sbr.rel (0) target = $region41
    $region40: #{tpu_custom_call.1} parent=1 // pred_region
      %s268 = ssub.s32 16, 16
      %269 = vsyncadd [#allocation5], %s268
      %s271 = sshll.u32 [#allocation8], 4
      %s272 = int_to_ptr.vmem [resolvable:$true] %s271
      %274 = dma.vmem_to_hbm [thread:$0]  %s272, 16, %s7, [#allocation5]
    $region41: #{tpu_custom_call.1} parent=1 // pred_fallthru
      _
    // Predicated region
    $region42: #{tpu_custom_call.1} parent=1 // pred_check
      _
    $region43: #{tpu_custom_call.1} parent=1 // pred_check_branch
      %276 = sbr.rel (0) target = $region45
    $region44: #{tpu_custom_call.1} parent=1 // pred_region
      %277 = dma.done [#allocation5], 16
    $region45: #{tpu_custom_call.1} parent=1 // pred_fallthru
      _
    %278 = vsyncpa [#allocation4], 1
    %279 = vsyncpa [#allocation7], 1
    %280 = vsyncpa [#allocation5], 1

// kernel: tpu_custom_call.1
$region0: #{tpu_custom_call.1}
  #allocation0 [shape = 'u32[]', space=smem, size = 0x4, offset = 0x4, fixed_abs, tag = 'smem constant byte address 0x4 - core index']
  #allocation1 [shape = 'u32[144,128]{1,0:T(1,128)}', space=vmem, size = 0x12000, scoped, tag = 'internal scratch']
  #allocation2 [shape = 'f32[1,1]{1,0:T(1,128)S(6)}', space=smem, size = 0x200, scoped, tag = 'scoped memory for tpu_custom_call.1']
  %s0 = inlined_call_operand.vmem [shape: f32[2,4], index: 0, kind: input, shape index: {}]
  %s1 = inlined_call_operand.hbm [shape: f32[2,2], index: 1, kind: input, shape index: {}]
  %s2 = inlined_call_operand.vmem [shape: f32[4,128], index: 2, kind: input, shape index: {}]
  %s3 = inlined_call_operand.vmem [shape: f32[2,128], index: 3, kind: input, shape index: {}]
  %s4 = inlined_call_operand.vmem [shape: f32[3,128], index: 4, kind: input, shape index: {}]
  %s5 = inlined_call_operand.hbm [shape: bf16[128,128], index: 5, kind: input, shape index: {}]
  %s6 = inlined_call_operand.<no memory space> [shape: f32[1,1], index: 6, kind: input, shape index: {}]
  %s7 = inlined_call_operand.hbm [shape: f32[1,1,2], index: 7, kind: output, shape index: {}]
  %s8 = sld [smem:[#allocation0]]
  $region46: #{tpu_custom_call.1} parent=0
    _
  %s10 = ssub.s32 1, %s8
  %s11 = scalar_select 0, %s10, %s8
  %12 = sst [smem:[#allocation2]] %s6
  $region1: #{tpu_custom_call.1} parent=0
    #allocation3 [shape = 'u8[1024]{0}', space=vmem, size = 0x400, scoped, tag = 'input window, operand 1, single buffered']
    #allocation4 [shape = 's32[1]{0}', space=sflag, size = 0x4, scoped, tag = 'scoped memory for tpu_custom_call.1']
    #allocation5 [shape = 's32[1]{0}', space=sflag, size = 0x4, scoped, tag = 'scoped memory for tpu_custom_call.1']
    #allocation6 [shape = 'u8[32768]{0}', space=vmem, size = 0x8000, scoped, tag = 'input window, operand 5, single buffered']
    #allocation7 [shape = 's32[1]{0}', space=sflag, size = 0x4, scoped, tag = 'scoped memory for tpu_custom_call.1']
    #allocation8 [shape = 'u8[512]{0}', space=vmem, size = 0x400, scoped, tag = 'output window, operand 0, single buffered']
    %13 = vsyncpa [#allocation4], 0
    %14 = vsyncpa [#allocation7], 0
    %15 = vsyncpa [#allocation5], 0
    // Predicated region
    $region2: #{tpu_custom_call.1} parent=1 // pred_check
      _
    $region3: #{tpu_custom_call.1} parent=1 // pred_check_branch
      %17 = sbr.rel (0) target = $region5
    $region4: #{tpu_custom_call.1} parent=1 // pred_region
      _
    $region5: #{tpu_custom_call.1} parent=1 // pred_fallthru
      _
    // Predicated region
    $region6: #{tpu_custom_call.1} parent=1 // pred_check
      _
    $region7: #{tpu_custom_call.1} parent=1 // pred_check_branch
      %19 = sbr.rel (0) target = $region9
    $region8: #{tpu_custom_call.1} parent=1 // pred_region
      %s21 = ssub.s32 32, 32
      %22 = vsyncadd [#allocation4], %s21
      %s24 = sshll.u32 [#allocation3], 4
      %s25 = int_to_ptr.vmem [resolvable:$true] %s24
      %27 = dma.hbm_to_vmem [thread:$0]  %s1, 32, %s25, [#allocation4]
    $region9: #{tpu_custom_call.1} parent=1 // pred_fallthru
      _
    // Predicated region
    $region10: #{tpu_custom_call.1} parent=1 // pred_check
      _
    $region11: #{tpu_custom_call.1} parent=1 // pred_check_branch
      %29 = sbr.rel (0) target = $region13
    $region12: #{tpu_custom_call.1} parent=1 // pred_region
      _
    $region13: #{tpu_custom_call.1} parent=1 // pred_fallthru
      _
    // Predicated region
    $region14: #{tpu_custom_call.1} parent=1 // pred_check
      _
    $region15: #{tpu_custom_call.1} parent=1 // pred_check_branch
      %31 = sbr.rel (0) target = $region17
    $region16: #{tpu_custom_call.1} parent=1 // pred_region
      _
    $region17: #{tpu_custom_call.1} parent=1 // pred_fallthru
      _
    // Predicated region
    $region18: #{tpu_custom_call.1} parent=1 // pred_check
      _
    $region19: #{tpu_custom_call.1} parent=1 // pred_check_branch
      %33 = sbr.rel (0) target = $region21
    $region20: #{tpu_custom_call.1} parent=1 // pred_region
      _
    $region21: #{tpu_custom_call.1} parent=1 // pred_fallthru
      _
    // Predicated region
    $region22: #{tpu_custom_call.1} parent=1 // pred_check
      _
    $region23: #{tpu_custom_call.1} parent=1 // pred_check_branch
      %35 = sbr.rel (0) target = $region25
    $region24: #{tpu_custom_call.1} parent=1 // pred_region
      %s37 = ssub.s32 1024, 1024
      %38 = vsyncadd [#allocation7], %s37
      %s39 = sshll.u32 [#allocation6], 4
      %s40 = int_to_ptr.vmem [resolvable:$true] %s39
      %45 = dma.hbm_to_vmem [thread:$0]  %s5, 1024, %s40, [#allocation7], 64, 64, 4
    $region25: #{tpu_custom_call.1} parent=1 // pred_fallthru
      _
    // Predicated region
    $region26: #{tpu_custom_call.1} parent=1 // pred_check
      _
    $region27: #{tpu_custom_call.1} parent=1 // pred_check_branch
      %47 = sbr.rel (0) target = $region29
    $region28: #{tpu_custom_call.1} parent=1 // pred_region
      _
    $region29: #{tpu_custom_call.1} parent=1 // pred_fallthru
      _
    // Predicated region
    $region30: #{tpu_custom_call.1} parent=1 // pred_check
      _
    $region31: #{tpu_custom_call.1} parent=1 // pred_check_branch
      %49 = sbr.rel (0) target = $region33
    $region32: #{tpu_custom_call.1} parent=1 // pred_region
      %50 = dma.done [#allocation4], 32
    $region33: #{tpu_custom_call.1} parent=1 // pred_fallthru
      _
    // Predicated region
    $region34: #{tpu_custom_call.1} parent=1 // pred_check
      _
    $region35: #{tpu_custom_call.1} parent=1 // pred_check_branch
      %52 = sbr.rel (0) target = $region37
    $region36: #{tpu_custom_call.1} parent=1 // pred_region
      %53 = dma.done [#allocation7], 1024
    $region37: #{tpu_custom_call.1} parent=1 // pred_fallthru
      _
    %v55 = vld [vmem:[%s4] sm:$0x1]
    %v56 = vld [vmem:[%s4 + $0x1] sm:$0x1]
    %v57 = vld [vmem:[%s4 + $0x2] sm:$0x1]
    %v58 = vld [vmem:[%s0] sm:$0x3]
    %v59 = vld [vmem:[#allocation3] sm:$0x3]
    %v60 = vlaneseq
    %v61 = vshrl.u32 %v60, 7
    %v62 = vsub.s32 0, %v61
    %v63 = vrot.slane %v55, %v62
    %v64 = vld [vmem:[%s2] sm:$0x1]
    %66 = vset.pattern.permute.xlu0 0
    %67 = vperm.xlu0 %66, %v58
    %v68 = vpop.permute.xlu0 %67
    %v70 = vlaneseq
    %v71 = vshrl.u32 %v70, 7
    %v72 = vsub.s32 0, %v71
    %v73 = vrot.slane %v64, %v72
    %v74 = vmul.f32 %v68, %v73
    %v75 = vadd.f32 %v63, %v74
    %v76 = vld [vmem:[%s2 + $0x1] sm:$0x1]
    %77 = vset.pattern.permute.xlu0 1
    %78 = vperm.xlu0 %77, %v58
    %v79 = vpop.permute.xlu0 %78
    %v81 = vlaneseq
    %v82 = vshrl.u32 %v81, 7
    %v83 = vsub.s32 0, %v82
    %v84 = vrot.slane %v76, %v83
    %v85 = vmul.f32 %v79, %v84
    %v86 = vadd.f32 %v75, %v85
    %v87 = vld [vmem:[%s2 + $0x2] sm:$0x1]
    %88 = vset.pattern.permute.xlu0 2
    %89 = vperm.xlu0 %88, %v58
    %v90 = vpop.permute.xlu0 %89
    %v92 = vlaneseq
    %v93 = vshrl.u32 %v92, 7
    %v94 = vsub.s32 0, %v93
    %v95 = vrot.slane %v87, %v94
    %v96 = vmul.f32 %v90, %v95
    %v97 = vadd.f32 %v86, %v96
    %v98 = vld [vmem:[%s2 + $0x3] sm:$0x1]
    %99 = vset.pattern.permute.xlu0 3
    %100 = vperm.xlu0 %99, %v58
    %v101 = vpop.permute.xlu0 %100
    %v103 = vlaneseq
    %v104 = vshrl.u32 %v103, 7
    %v105 = vsub.s32 0, %v104
    %v106 = vrot.slane %v98, %v105
    %v107 = vmul.f32 %v101, %v106
    %v108 = vadd.f32 %v97, %v107
    %v109 = vld [vmem:[%s3] sm:$0x1]
    %111 = vset.pattern.permute.xlu0 0
    %112 = vperm.xlu0 %111, %v59
    %v113 = vpop.permute.xlu0 %112
    %v115 = vlaneseq
    %v116 = vshrl.u32 %v115, 7
    %v117 = vsub.s32 0, %v116
    %v118 = vrot.slane %v109, %v117
    %v119 = vmul.f32 %v113, %v118
    %v120 = vadd.f32 %v108, %v119
    %v121 = vld [vmem:[%s3 + $0x1] sm:$0x1]
    %122 = vset.pattern.permute.xlu0 1
    %123 = vperm.xlu0 %122, %v59
    %v124 = vpop.permute.xlu0 %123
    %v126 = vlaneseq
    %v127 = vshrl.u32 %v126, 7
    %v128 = vsub.s32 0, %v127
    %v129 = vrot.slane %v121, %v128
    %v130 = vmul.f32 %v124, %v129
    %v131 = vadd.f32 %v120, %v130
    %v132 = vmax.f32 %v131, 0.0
    %v133 = vpack.c.bf16 %v132, %v132
    %v134 = vld [vmem:[#allocation6] sm:$0xf]
    %v135 = vld [vmem:[#allocation6 + $0x4] sm:$0xf]
    %v136 = vld [vmem:[#allocation6 + $0x8] sm:$0xf]
    %v137 = vld [vmem:[#allocation6 + $0xc] sm:$0xf]
    %v138 = vld [vmem:[#allocation6 + $0x10] sm:$0xf]
    %v139 = vld [vmem:[#allocation6 + $0x14] sm:$0xf]
    %v140 = vld [vmem:[#allocation6 + $0x18] sm:$0xf]
    %v141 = vld [vmem:[#allocation6 + $0x1c] sm:$0xf]
    %v142 = vld [vmem:[#allocation6 + $0x20] sm:$0xf]
    %v143 = vld [vmem:[#allocation6 + $0x24] sm:$0xf]
    %v144 = vld [vmem:[#allocation6 + $0x28] sm:$0xf]
    %v145 = vld [vmem:[#allocation6 + $0x2c] sm:$0xf]
    %v146 = vld [vmem:[#allocation6 + $0x30] sm:$0xf]
    %v147 = vld [vmem:[#allocation6 + $0x34] sm:$0xf]
    %v148 = vld [vmem:[#allocation6 + $0x38] sm:$0xf]
    %v149 = vld [vmem:[#allocation6 + $0x3c] sm:$0xf]
    %v150 = vlaneseq
    %v151 = vshrl.u32 %v150, 7
    %v152 = vsub.s32 0, %v151
    %v153 = vrot.slane %v56, %v152
    %v170 = vunpack.c.l.b16 %v134
    %v171 = vunpack.c.l.b16 %v135
    %v172 = vunpack.c.l.b16 %v136
    %v173 = vunpack.c.l.b16 %v137
    %v174 = vunpack.c.l.b16 %v138
    %v175 = vunpack.c.l.b16 %v139
    %v176 = vunpack.c.l.b16 %v140
    %v177 = vunpack.c.l.b16 %v141
    %v178 = vunpack.c.l.b16 %v142
    %v179 = vunpack.c.l.b16 %v143
    %v180 = vunpack.c.l.b16 %v144
    %v181 = vunpack.c.l.b16 %v145
    %v182 = vunpack.c.l.b16 %v146
    %v183 = vunpack.c.l.b16 %v147
    %v184 = vunpack.c.l.b16 %v148
    %v185 = vunpack.c.l.b16 %v149
    %v186 = vpack.c.b16 %v171, %v170
    %v187 = vpack.c.b16 %v173, %v172
    %v188 = vpack.c.b16 %v175, %v174
    %v189 = vpack.c.b16 %v177, %v176
    %v190 = vpack.c.b16 %v179, %v178
    %v191 = vpack.c.b16 %v181, %v180
    %v192 = vpack.c.b16 %v183, %v182
    %v193 = vpack.c.b16 %v185, %v184
    %202 = vmatprep.subr.bf16.mxu0 0
    %203 = vmatpush1.bf16.msra.mxu0 %v186
    %204 = vmatprep.subr.bf16.mxu0 0
    %205 = vmatpush1.bf16.msra.mxu0 %v187
    %206 = vmatprep.subr.bf16.mxu0 0
    %207 = vmatpush1.bf16.msra.mxu0 %v188
    %208 = vmatprep.subr.bf16.mxu0 0
    %209 = vmatpush1.bf16.msra.mxu0 %v189
    %210 = vmatprep.subr.bf16.mxu0 0
    %211 = vmatpush1.bf16.msra.mxu0 %v190
    %212 = vmatprep.subr.bf16.mxu0 0
    %213 = vmatpush1.bf16.msra.mxu0 %v191
    %214 = vmatprep.subr.bf16.mxu0 0
    %215 = vmatpush1.bf16.msra.mxu0 %v192
    %216 = vmatprep.subr.bf16.mxu0 0
    %217 = vmatpush1.bf16.msra.mxu0 %v193
    %218 = vmatprep.subr.bf16.mxu0 0
    %219 = vmatpush1.bf16.msra.mxu0 0
    %220 = vmatprep.subr.bf16.mxu0 0
    %221 = vmatpush1.bf16.msra.mxu0 0
    %222 = vmatprep.subr.bf16.mxu0 0
    %223 = vmatpush1.bf16.msra.mxu0 0
    %224 = vmatprep.subr.bf16.mxu0 0
    %225 = vmatpush1.bf16.msra.mxu0 0
    %226 = vmatprep.subr.bf16.mxu0 0
    %227 = vmatpush1.bf16.msra.mxu0 0
    %228 = vmatprep.subr.bf16.mxu0 0
    %229 = vmatpush1.bf16.msra.mxu0 0
    %230 = vmatprep.subr.bf16.mxu0 0
    %231 = vmatpush1.bf16.msra.mxu0 0
    %232 = vmatprep.subr.bf16.mxu0 0
    %233 = vmatpush1.bf16.msra.mxu0 0
    %234 = vmatprep.mubr.bf16.mxu0 0
    %235 = vmatmul.mubr.bf16.gmra.mrb[0].mxu0 %v133
    %v236 = vpop.f32.mrb[0].mxu0
    %v237 = vadd.f32 %v153, %v236
    %v238 = vpop.f32.mrb[0].mxu0
    %v239 = vpop.f32.mrb[0].mxu0
    %v240 = vpop.f32.mrb[0].mxu0
    %241 = vdwg.mxu0
    %v242 = vmax.f32 %v237, 0.0
    %v243 = vlaneseq
    %v244 = vshrl.u32 %v243, 7
    %v245 = vsub.s32 0, %v244
    %v246 = vrot.slane %v57, %v245
    %v247 = vmul.f32 %v242, %v246
    %vm248 = vcmask 1041408
    %v249 = vsel %vm248, %v247, 0.0
    %250 = vadd.xlane.f32.xlu0 %v249
    %v251 = vpop.xlane.xlu0 %250
    %s252 = sld [smem:[#allocation2]]
    %v253 = vstv %s252
    %v254 = vadd.f32 %v251, %v253
    %v256 = vlaneseq
    %v257 = vand.u32 %v256, 127
    %v258 = vlaneseq
    %v259 = vshrl.u32 %v258, 7
    %v260 = vsub.s32 %v257, %v259
    %v261 = vrot.slane %v254, %v260
    %vm263 = vcmask 8192
    %264 = vst.msk [vmem:[#allocation8] sm:$0x1] %vm263, %v261
    // Predicated region
    $region38: #{tpu_custom_call.1} parent=1 // pred_check
      _
    $region39: #{tpu_custom_call.1} parent=1 // pred_check_branch
      %266 = sbr.rel (0) target = $region41
    $region40: #{tpu_custom_call.1} parent=1 // pred_region
      %s268 = ssub.s32 16, 16
      %269 = vsyncadd [#allocation5], %s268
      %s271 = sshll.u32 [#allocation8], 4
      %s272 = int_to_ptr.vmem [resolvable:$true] %s271
      %274 = dma.vmem_to_hbm [thread:$0]  %s272, 16, %s7, [#allocation5]
    $region41: #{tpu_custom_call.1} parent=1 // pred_fallthru
      _
    // Predicated region
    $region42: #{tpu_custom_call.1} parent=1 // pred_check
      _
    $region43: #{tpu_custom_call.1} parent=1 // pred_check_branch
      %276 = sbr.rel (0) target = $region45
    $region44: #{tpu_custom_call.1} parent=1 // pred_region
      %277 = dma.done [#allocation5], 16
    $region45: #{tpu_custom_call.1} parent=1 // pred_fallthru
      _
    %278 = vsyncpa [#allocation4], 1
    %279 = vsyncpa [#allocation7], 1
    %280 = vsyncpa [#allocation5], 1

</llo_original>
